<compile_context>
chip_gen: v7x
topology: tpu7x:2x2x1
jax: 0.10.0
libtpu: 0.0.40
codegen_flags: <defaults>
</compile_context>

<pallas_src>
import functools

import jax
import jax.numpy as jnp
from jax.experimental import pallas as pl
from jax.experimental.pallas import tpu as pltpu


def _layernorm_kernel(x_ref, a_ref, b_ref, o_ref, *, eps, n_feat):
    # x_ref: (tile_rows, F); a_ref / b_ref: (1, F) (resident, constant index_map)
    x = x_ref[...].astype(jnp.float32)
    a = a_ref[...].astype(jnp.float32)
    b = b_ref[...].astype(jnp.float32)

    # Two-pass reduction kept for f32 accuracy (avoids sum/sumsq cancellation);
    # a fused single-pass variant is only worthwhile if profiling shows the
    # kernel is VPU/XLU-bound (v7x, bf16 I/O) AND it still passes 1e-5 parity.
    mean = jnp.mean(x, axis=-1, keepdims=True)
    centered = x - mean
    denom = max(n_feat - 1, 1)  # guard the degenerate n_feat == 1 case
    var = jnp.sum(centered * centered, axis=-1, keepdims=True) * (1.0 / denom)
    std = jnp.sqrt(var)

    # Per-row reciprocal (shape (tile_rows, 1)) instead of a (tile_rows, F)
    # divide; exact to keep 1e-5 parity with the torch reference.
    inv = pl.reciprocal(std + eps, approx=False)

    y = centered * inv * a + b
    o_ref[...] = y.astype(o_ref.dtype)


def _tpu_vmem_capacity_bytes():
    """Per-TensorCore VMEM capacity; conservative default if query fails."""
    try:
        return int(pltpu.get_tpu_info().vmem_capacity_bytes)
    except Exception:
        return 128 << 20  # v5e/v6e-class default


def _generation_budget():
    """Derive (vmem_limit_bytes, target_block_bytes, min_grid_steps) per chip."""
    vmem = _tpu_vmem_capacity_bytes()
    if vmem <= (64 << 20):
        # v7x-class: 64 MiB/TC physical, 2 TCs/chip.  Leave headroom for
        # compiler-internal scratch + in-kernel temporaries; keep >=4 grid
        # steps so both TensorCores get work via dimension_semantics.
        return 48 << 20, 4 << 20, 4
    # v5e/v6e-class: 128 MiB VMEM, 1 TC.  Bigger blocks amortize the ~0.35 us
    # per-step overhead; only need >=2 steps (no megacore to feed).
    return 96 << 20, 12 << 20, 2


def _sublane_multiple(dtype):
    """Native sublane packing: 8 rows for f32, 16 for bf16, 32 for int8/fp8."""
    itemsize = jnp.dtype(dtype).itemsize
    return max(8, 32 // max(itemsize, 1))


def _choose_tile_rows(rows, feat, dtype, *, target_block_bytes, min_grid_steps,
                      vmem_limit_bytes):
    """Row tile sized to the per-generation block budget.

    Real VMEM footprint per step ~= 2x in + 2x out (double buffer) + ~3
    block-sized f32 temps (upcast x, centered, y), so we also check the full
    footprint against the VMEM limit, not just the raw block bytes.
    """
    sub = _sublane_multiple(dtype)
    itemsize = jnp.dtype(dtype).itemsize
    if rows <= sub:
        return rows

    # Bytes per row including double-buffered in/out and f32 temporaries.
    per_row_footprint = feat * (4 * itemsize + 3 * 4)
    per_row_block = max(feat * itemsize, 1)

    tile = target_block_bytes // per_row_block
    # Never exceed ~the VMEM limit once temporaries are counted.
    tile = min(tile, max(vmem_limit_bytes // max(per_row_footprint, 1), sub))
    # Keep enough grid steps for the chip's TensorCore count.
    tile = min(tile, max(rows // min_grid_steps, sub))
    # Sublane-aligned block rows for the input dtype.
    tile = max(sub, (tile // sub) * sub)
    # TODO(synk): for very large F (F*itemsize*sub >> block budget) switch to a
    # chunked feature-axis reduction; this path falls back to the minimal
    # sublane-aligned row tile and may spill.
    if tile >= rows:
        return rows
    return int(tile)


def layer_norm(x, a_2, b_2, eps=1e-6, *, tile_rows=None):
    """Pallas LayerNorm matching the PyTorch module's forward semantics."""
    orig_shape = x.shape
    F = orig_shape[-1]
    x2d = x.reshape(-1, F)
    R = x2d.shape[0]

    vmem_limit_bytes, target_block_bytes, min_grid_steps = _generation_budget()

    if tile_rows is None:
        tile_rows = _choose_tile_rows(
            R, F, x.dtype,
            target_block_bytes=target_block_bytes,
            min_grid_steps=min_grid_steps,
            vmem_limit_bytes=vmem_limit_bytes,
        )
    tile_rows = min(tile_rows, R)

    a2d = a_2.reshape(1, F)
    b2d = b_2.reshape(1, F)

    kernel = functools.partial(_layernorm_kernel, eps=eps, n_feat=F)

    # Ragged last block handled by Pallas edge masking -- no host pad/slice.
    grid = (pl.cdiv(R, tile_rows),)

    out = pl.pallas_call(
        kernel,
        out_shape=jax.ShapeDtypeStruct((R, F), x.dtype),
        grid_spec=pltpu.PrefetchScalarGridSpec(
            num_scalar_prefetch=0,
            grid=grid,
            in_specs=[
                pl.BlockSpec((tile_rows, F), lambda i: (i, 0)),
                pl.BlockSpec((1, F), lambda i: (0, 0)),
                pl.BlockSpec((1, F), lambda i: (0, 0)),
            ],
            out_specs=pl.BlockSpec((tile_rows, F), lambda i: (i, 0)),
        ),
        compiler_params=pltpu.CompilerParams(
            dimension_semantics=("parallel",),
            vmem_limit_bytes=vmem_limit_bytes,
        ),
    )(x2d, a2d, b2d)

    return out.reshape(orig_shape)


if __name__ == "__main__":
    key = jax.random.PRNGKey(0)
    batch, seq, hidden = 2, 8, 32

    x = jax.random.normal(key, (batch, seq, hidden), dtype=jnp.float32)

    # Parameters as defined in LayerNorm.__init__: a_2 = ones, b_2 = zeros
    a_2 = jnp.ones((hidden,), dtype=jnp.float32)
    b_2 = jnp.zeros((hidden,), dtype=jnp.float32)
    eps = 1e-6

    out = layer_norm(x, a_2, b_2, eps)
    out = jax.block_until_ready(out)

    # Reference in plain JAX (unbiased std, matching torch.std default).
    mean = jnp.mean(x, axis=-1, keepdims=True)
    std = jnp.sqrt(
        jnp.sum((x - mean) ** 2, axis=-1, keepdims=True) / (hidden - 1)
    )
    ref = a_2 * (x - mean) / (std + eps) + b_2

    assert out.shape == x.shape and out.dtype == x.dtype
    assert jnp.allclose(out, ref, atol=1e-5, rtol=1e-5)
    print("KERNEL_OK")
</pallas_src>

<mosaic_0001>
module attributes {stable_mosaic.version = 11 : i64} {
  func.func @_layernorm_kernel(%arg0: i32, %arg1: memref<8x32xf32, #tpu.memory_space<vmem>>, %arg2: memref<1x32xf32, #tpu.memory_space<vmem>>, %arg3: memref<1x32xf32, #tpu.memory_space<vmem>>, %arg4: memref<8x32xf32, #tpu.memory_space<vmem>>) attributes {dimension_semantics = [#tpu.dimension_semantics<parallel>], iteration_bounds = array<i64: 2>, scalar_prefetch = 0 : i64, scratch_operands = 0 : i64, tpu.core_type = #tpu.core_type<tc>, window_params = [{transform_indices = @transform_0, window_bounds = array<i64: 8, 32>}, {pipeline_mode = #tpu.pipeline_mode<synchronous>, transform_indices = @transform_1, window_bounds = array<i64: 1, 32>}, {pipeline_mode = #tpu.pipeline_mode<synchronous>, transform_indices = @transform_2, window_bounds = array<i64: 1, 32>}, {transform_indices = @transform_3, window_bounds = array<i64: 8, 32>}]} {
    %c0 = arith.constant 0 : index
    %c0_0 = arith.constant 0 : index
    %0 = vector.load %arg1[%c0, %c0_0] : memref<8x32xf32, #tpu.memory_space<vmem>>, vector<8x32xf32>
    %c0_1 = arith.constant 0 : index
    %c0_2 = arith.constant 0 : index
    %1 = vector.load %arg2[%c0_1, %c0_2] : memref<1x32xf32, #tpu.memory_space<vmem>>, vector<1x32xf32>
    %c0_3 = arith.constant 0 : index
    %c0_4 = arith.constant 0 : index
    %2 = vector.load %arg3[%c0_3, %c0_4] : memref<1x32xf32, #tpu.memory_space<vmem>>, vector<1x32xf32>
    %cst = arith.constant dense<0.000000e+00> : vector<8xf32>
    %3 = vector.multi_reduction <add>, %0, %cst [1] : vector<8x32xf32> to vector<8xf32>
    %4 = vector.shape_cast %3 : vector<8xf32> to vector<8x1xf32>
    %cst_5 = arith.constant 3.200000e+01 : f32
    %5 = vector.broadcast %cst_5 : f32 to vector<8x1xf32>
    %6 = arith.divf %4, %5 : vector<8x1xf32>
    %7 = vector.broadcast %6 : vector<8x1xf32> to vector<8x32xf32>
    %8 = arith.subf %0, %7 : vector<8x32xf32>
    %9 = arith.mulf %8, %8 : vector<8x32xf32>
    %cst_6 = arith.constant dense<0.000000e+00> : vector<8xf32>
    %10 = vector.multi_reduction <add>, %9, %cst_6 [1] : vector<8x32xf32> to vector<8xf32>
    %11 = vector.shape_cast %10 : vector<8xf32> to vector<8x1xf32>
    %cst_7 = arith.constant 0.0322580636 : f32
    %12 = vector.broadcast %cst_7 : f32 to vector<8x1xf32>
    %13 = arith.mulf %11, %12 : vector<8x1xf32>
    %14 = math.sqrt %13 : vector<8x1xf32>
    %cst_8 = arith.constant 9.99999997E-7 : f32
    %15 = vector.broadcast %cst_8 : f32 to vector<8x1xf32>
    %16 = arith.addf %14, %15 : vector<8x1xf32>
    %17 = tpu.reciprocal %16 : vector<8x1xf32> -> vector<8x1xf32>
    %18 = vector.broadcast %17 : vector<8x1xf32> to vector<8x32xf32>
    %19 = arith.mulf %8, %18 : vector<8x32xf32>
    %20 = vector.broadcast %1 : vector<1x32xf32> to vector<8x32xf32>
    %21 = arith.mulf %19, %20 : vector<8x32xf32>
    %22 = vector.broadcast %2 : vector<1x32xf32> to vector<8x32xf32>
    %23 = arith.addf %21, %22 : vector<8x32xf32>
    %c0_9 = arith.constant 0 : index
    %c0_10 = arith.constant 0 : index
    %24 = vector.load %arg4[%c0_9, %c0_10] : memref<8x32xf32, #tpu.memory_space<vmem>>, vector<8x32xf32>
    tpu.vector_store %arg4[%c0_9, %c0_10], %23 {strides = array<i32>} : memref<8x32xf32, #tpu.memory_space<vmem>>, vector<8x32xf32>,
    return
  }
  func.func @transform_0(%arg0: i32) -> (i32, i32) {
    %c0_i32 = arith.constant 0 : i32
    %c0_i32_0 = arith.constant 0 : i32
    return %arg0, %c0_i32 : i32, i32
  }
  func.func @transform_1(%arg0: i32) -> (i32, i32) {
    %c0_i32 = arith.constant 0 : i32
    %c0_i32_0 = arith.constant 0 : i32
    %c0_i32_1 = arith.constant 0 : i32
    return %c0_i32, %c0_i32_0 : i32, i32
  }
  func.func @transform_2(%arg0: i32) -> (i32, i32) {
    %c0_i32 = arith.constant 0 : i32
    %c0_i32_0 = arith.constant 0 : i32
    %c0_i32_1 = arith.constant 0 : i32
    return %c0_i32, %c0_i32_0 : i32, i32
  }
  func.func @transform_3(%arg0: i32) -> (i32, i32) {
    %c0_i32 = arith.constant 0 : i32
    %c0_i32_0 = arith.constant 0 : i32
    return %arg0, %c0_i32 : i32, i32
  }
}

</mosaic_0001>

<llo_original>
// kernel: tpu_custom_call.1
$region0: #{tpu_custom_call.1}
  #allocation0 [shape = 'u32[]', space=smem, size = 0x4, offset = 0x4, fixed_abs, tag = 'smem constant byte address 0x4 - core index']
  #allocation1 [shape = 'u32[144,128]{1,0:T(1,128)}', space=vmem, size = 0x12000, scoped, tag = 'internal scratch']
  %s0 = inlined_call_operand.hbm [shape: f32[16,32], index: 0, kind: input, shape index: {}]
  %s1 = inlined_call_operand.hbm [shape: f32[1,32], index: 1, kind: input, shape index: {}]
  %s2 = inlined_call_operand.hbm [shape: f32[1,32], index: 2, kind: input, shape index: {}]
  %s3 = inlined_call_operand.hbm [shape: f32[16,32], index: 3, kind: output, shape index: {}]
  %s4 = sld [smem:[#allocation0]]
  $region57: #{tpu_custom_call.1} parent=0
    _
  %s6 = ssub.s32 1, %s4
  %s7 = scalar_select 0, %s6, %s4
  $region1: #{tpu_custom_call.1} parent=0
    #allocation2 [shape = 'u8[8192]{0}', space=vmem, size = 0x2000, scoped, tag = 'input window, operand 0']
    #allocation3 [shape = 's32[2]{0}', space=sflag, size = 0x8, scoped, tag = 'scoped memory for tpu_custom_call.1']
    #allocation4 [shape = 's32[2]{0}', space=sflag, size = 0x8, scoped, tag = 'scoped memory for tpu_custom_call.1']
    #allocation5 [shape = 'u8[512]{0}', space=vmem, size = 0x400, scoped, tag = 'input window, operand 1, single buffered']
    #allocation6 [shape = 's32[1]{0}', space=sflag, size = 0x4, scoped, tag = 'scoped memory for tpu_custom_call.1']
    #allocation7 [shape = 'u8[512]{0}', space=vmem, size = 0x400, scoped, tag = 'input window, operand 2, single buffered']
    #allocation8 [shape = 'u8[8192]{0}', space=vmem, size = 0x2000, scoped, tag = 'output window, operand 0']
    %8 = vsyncpa [#allocation3], 0
    %s9 = scalar_lea.sflag [#allocation3], 1
    %10 = vsyncpa %s9, 0
    %11 = vsyncpa [#allocation6], 0
    %12 = vsyncpa [#allocation4], 0
    %s13 = scalar_lea.sflag [#allocation4], 1
    %14 = vsyncpa %s13, 0
    loop: start=0, step=1, limit=4
    $region2: #{tpu_custom_call.1} parent=1 // loop_pre_header
      _
    $region3: #{tpu_custom_call.1} parent=1 // loop_header
      %s16 = sphi 0, %s20
      %p17 = scmp.ge.s32.totalorder %s16, 4
      %s26 = sphi 0, %s28
      %s29 = sphi 0, %s26
      %s30 = sphi 0, %s29
      %s46 = sphi 0, %s30
      %s50 = sphi 0, %s50
      %s52 = sphi 0, %s50
      %s53 = sphi 0, %s52
      %s67 = sphi 0, %s53
      %s71 = sphi 0, %s71
      %s73 = sphi 0, %s71
      %s74 = sphi 0, %s73
      %s88 = sphi 0, %s74
      %s94 = sphi 0, %s96
      %s97 = sphi 0, %s94
      %s98 = sphi 0, %s97
      %s114 = sphi 0, %s98
    $region4: #{tpu_custom_call.1} parent=1 // loop_header_branch
      %19 = sbr.rel (%p17) target = $region8
    $region5: #{tpu_custom_call.1} parent=1 // loop_body
      %s21 = ssub.s32 %s16, 1
      %s22 = ssub.s32 %s16, 2
      %s23 = sadd.s32 %s16, 1
      %s24 = ssub.s32 %s16, %s23
      %p25 = scmp.eq.s32.totalorder %s24, 0
      %s27 = sadd.s32 %s26, 1
      %s28 = scalar_select %p25, %s26, %s27
      %p31 = pneg %p25
      %p32 = scmp.eq.s32.totalorder %s16, 1
      %p33 = por %p31, %p32
      %p34 = scmp.ne.s32.totalorder %s26, %s29
      %p35 = scmp.eq.s32.totalorder %s16, 0
      %p36 = por %p34, %p35
      %p37 = scmp.ne.s32.totalorder %s26, %s29
      %p38 = scmp.eq.s32.totalorder %s21, 1
      %p39 = por %p37, %p38
      %p40 = scmp.ne.s32.totalorder %s29, %s30
      %p41 = scmp.eq.s32.totalorder %s21, 0
      %p42 = por %p40, %p41
      %p43 = scmp.ne.s32.totalorder %s29, %s30
      %p44 = scmp.eq.s32.totalorder %s22, 1
      %p45 = por %p43, %p44
      %p47 = scmp.ne.s32.totalorder %s30, %s46
      %p48 = scmp.eq.s32.totalorder %s22, 0
      %p49 = por %p47, %p48
      %s51 = sadd.s32 %s50, 1
      %p54 = scmp.eq.s32.totalorder %s16, 1
      %p55 = scmp.ne.s32.totalorder %s50, %s52
      %p56 = scmp.eq.s32.totalorder %s16, 0
      %p57 = por %p55, %p56
      %p58 = scmp.ne.s32.totalorder %s50, %s52
      %p59 = scmp.eq.s32.totalorder %s21, 1
      %p60 = por %p58, %p59
      %p61 = scmp.ne.s32.totalorder %s52, %s53
      %p62 = scmp.eq.s32.totalorder %s21, 0
      %p63 = por %p61, %p62
      %p64 = scmp.ne.s32.totalorder %s52, %s53
      %p65 = scmp.eq.s32.totalorder %s22, 1
      %p66 = por %p64, %p65
      %p68 = scmp.ne.s32.totalorder %s53, %s67
      %p69 = scmp.eq.s32.totalorder %s22, 0
      %p70 = por %p68, %p69
      %s72 = sadd.s32 %s71, 1
      %p75 = scmp.eq.s32.totalorder %s16, 1
      %p76 = scmp.ne.s32.totalorder %s71, %s73
      %p77 = scmp.eq.s32.totalorder %s16, 0
      %p78 = por %p76, %p77
      %p79 = scmp.ne.s32.totalorder %s71, %s73
      %p80 = scmp.eq.s32.totalorder %s21, 1
      %p81 = por %p79, %p80
      %p82 = scmp.ne.s32.totalorder %s73, %s74
      %p83 = scmp.eq.s32.totalorder %s21, 0
      %p84 = por %p82, %p83
      %p85 = scmp.ne.s32.totalorder %s73, %s74
      %p86 = scmp.eq.s32.totalorder %s22, 1
      %p87 = por %p85, %p86
      %p89 = scmp.ne.s32.totalorder %s74, %s88
      %p90 = scmp.eq.s32.totalorder %s22, 0
      %p91 = por %p89, %p90
      %s92 = ssub.s32 %s16, %s23
      %p93 = scmp.eq.s32.totalorder %s92, 0
      %s95 = sadd.s32 %s94, 1
      %s96 = scalar_select %p93, %s94, %s95
      %p99 = pneg %p93
      %p100 = scmp.eq.s32.totalorder %s16, 1
      %p101 = por %p99, %p100
      %p102 = scmp.ne.s32.totalorder %s94, %s97
      %p103 = scmp.eq.s32.totalorder %s16, 0
      %p104 = por %p102, %p103
      %p105 = scmp.ne.s32.totalorder %s94, %s97
      %p106 = scmp.eq.s32.totalorder %s21, 1
      %p107 = por %p105, %p106
      %p108 = scmp.ne.s32.totalorder %s97, %s98
      %p109 = scmp.eq.s32.totalorder %s21, 0
      %p110 = por %p108, %p109
      %p111 = scmp.ne.s32.totalorder %s97, %s98
      %p112 = scmp.eq.s32.totalorder %s22, 1
      %p113 = por %p111, %p112
      %p115 = scmp.ne.s32.totalorder %s98, %s114
      %p116 = scmp.eq.s32.totalorder %s22, 0
      %p117 = por %p115, %p116
      %p118 = scmp.le.s32.totalorder 1, %s16
      %p119 = scmp.lt.s32.totalorder %s16, 3
      %p120 = pnand %p118, %p119
      %p121 = pneg %p120
      // Predicated region
      $region9: #{tpu_custom_call.1} parent=5 // pred_check
        _
      $region10: #{tpu_custom_call.1} parent=5 // pred_check_branch
        %123 = sbr.rel (%p120) target = $region12
      $region11: #{tpu_custom_call.1} parent=5 // pred_region
        %s124 = ssub.s32 %s16, 1
        // Predicated region
        $region13: #{tpu_custom_call.1} parent=11 // pred_check
          %p125 = pneg %p63
        $region14: #{tpu_custom_call.1} parent=11 // pred_check_branch
          %127 = sbr.rel (%p125) target = $region16
        $region15: #{tpu_custom_call.1} parent=11 // pred_region
          %s129 = ssub.s32 16, 16
          %130 = vsyncadd [#allocation6], %s129
          %s132 = sshll.u32 [#allocation5], 4
          %s133 = int_to_ptr.vmem [resolvable:$true] %s132
          %135 = dma.hbm_to_vmem [thread:$0]  %s1, 16, %s133, [#allocation6]
        $region16: #{tpu_custom_call.1} parent=11 // pred_fallthru
          _
        // Predicated region
        $region17: #{tpu_custom_call.1} parent=11 // pred_check
          %p136 = pneg %p84
        $region18: #{tpu_custom_call.1} parent=11 // pred_check_branch
          %138 = sbr.rel (%p136) target = $region20
        $region19: #{tpu_custom_call.1} parent=11 // pred_region
          %s140 = ssub.s32 16, 16
          %141 = vsyncadd [#allocation6], %s140
          %s143 = sshll.u32 [#allocation7], 4
          %s144 = int_to_ptr.vmem [resolvable:$true] %s143
          %146 = dma.hbm_to_vmem [thread:$0]  %s2, 16, %s144, [#allocation6]
        $region20: #{tpu_custom_call.1} parent=11 // pred_fallthru
          _
      $region12: #{tpu_custom_call.1} parent=5 // pred_fallthru
        _
      %p147 = scmp.lt.s32.totalorder %s16, 2
      // Predicated region
      $region21: #{tpu_custom_call.1} parent=5 // pred_check
        %p148 = pneg %p147
      $region22: #{tpu_custom_call.1} parent=5 // pred_check_branch
        %150 = sbr.rel (%p148) target = $region24
      $region23: #{tpu_custom_call.1} parent=5 // pred_region
        // Predicated region
        $region25: #{tpu_custom_call.1} parent=23 // pred_check
          %p151 = pneg %p36
        $region26: #{tpu_custom_call.1} parent=23 // pred_check_branch
          %153 = sbr.rel (%p151) target = $region28
        $region27: #{tpu_custom_call.1} parent=23 // pred_region
          %s154 = sand.u32 %s26, 1
          %s155 = scalar_lea.sflag [#allocation3], %s154
          %s156 = sand.u32 %s26, 1
          %s157 = smul.addr %s156, 8
          %s158 = scalar_lea.vmem [#allocation2], %s157
          %s160 = ssub.s32 128, 128
          %161 = vsyncadd %s155, %s160
          %s162 = smul.addr %s16, 128
          %s163 = scalar_lea.hbm %s0, %s162
          %s165 = sshll.u32 %s158, 4
          %s166 = int_to_ptr.vmem [resolvable:$true] %s165
          %168 = dma.hbm_to_vmem [thread:$0]  %s163, 128, %s166, %s155
        $region28: #{tpu_custom_call.1} parent=23 // pred_fallthru
          _
      $region24: #{tpu_custom_call.1} parent=5 // pred_fallthru
        _
      %p169 = scmp.le.s32.totalorder 1, %s16
      %p170 = scmp.lt.s32.totalorder %s16, 3
      %p171 = pnand %p169, %p170
      %p172 = pneg %p171
      // Predicated region
      $region29: #{tpu_custom_call.1} parent=5 // pred_check
        _
      $region30: #{tpu_custom_call.1} parent=5 // pred_check_branch
        %174 = sbr.rel (%p171) target = $region32
      $region31: #{tpu_custom_call.1} parent=5 // pred_region
        %s175 = ssub.s32 %s16, 1
        %s176 = sand.u32 %s29, 1
        %s177 = scalar_lea.sflag [#allocation3], %s176
        %s178 = sand.u32 %s29, 1
        %s179 = smul.addr %s178, 8
        %s180 = scalar_lea.vmem [#allocation2], %s179
        // Predicated region
        $region33: #{tpu_custom_call.1} parent=31 // pred_check
          %p181 = pneg %p42
        $region34: #{tpu_custom_call.1} parent=31 // pred_check_branch
          %183 = sbr.rel (%p181) target = $region36
        $region35: #{tpu_custom_call.1} parent=31 // pred_region
          %184 = dma.done %s177, 128
        $region36: #{tpu_custom_call.1} parent=31 // pred_fallthru
          _
        // Predicated region
        $region37: #{tpu_custom_call.1} parent=31 // pred_check
          %p185 = pneg %p63
        $region38: #{tpu_custom_call.1} parent=31 // pred_check_branch
          %187 = sbr.rel (%p185) target = $region40
        $region39: #{tpu_custom_call.1} parent=31 // pred_region
          %188 = dma.done [#allocation6], 16
        $region40: #{tpu_custom_call.1} parent=31 // pred_fallthru
          _
        // Predicated region
        $region41: #{tpu_custom_call.1} parent=31 // pred_check
          %p189 = pneg %p84
        $region42: #{tpu_custom_call.1} parent=31 // pred_check_branch
          %191 = sbr.rel (%p189) target = $region44
        $region43: #{tpu_custom_call.1} parent=31 // pred_region
          %192 = dma.done [#allocation6], 16
        $region44: #{tpu_custom_call.1} parent=31 // pred_fallthru
          _
        %s193 = sand.u32 %s29, 1
        %s194 = scalar_lea.sflag [#allocation3], %s193
        %s195 = sand.u32 %s29, 1
        %s196 = smul.addr %s195, 8
        %s197 = scalar_lea.vmem [#allocation2], %s196
        %p198 = pneg %p42
        %p199 = pneg %p39
        %p200 = pneg %p63
        %p201 = pneg %p60
        %p202 = pneg %p84
        %p203 = pneg %p81
        %p204 = pneg %p110
        %p205 = pneg %p107
        %s206 = sand.u32 %s97, 1
        %s207 = scalar_lea.sflag [#allocation4], %s206
        %s208 = sand.u32 %s97, 1
        %s209 = smul.addr %s208, 8
        %s210 = scalar_lea.vmem [#allocation8], %s209
        %v211 = vld [vmem:[%s180] sm:$0xff]
        %v212 = vld [vmem:[#allocation5] sm:$0x1]
        %v213 = vld [vmem:[#allocation7] sm:$0x1]
        %vm214 = vcmask 261120
        %v215 = vsel %vm214, %v211, 0.0
        %216 = vadd.xlane.f32.xlu0 %v215
        %v217 = vpop.xlane.xlu0 %216
        %v218 = vrcp.pop 32.0
        %v219 = vmul.f32 %v217, %v218
        %v220 = vsub.f32 %v211, %v219
        %v221 = vmul.f32 %v220, %v220
        %v222 = vsel %vm214, %v221, 0.0
        %223 = vadd.xlane.f32.xlu0 %v222
        %v224 = vpop.xlane.xlu0 %223
        %v225 = vmul.f32 %v224, 0.032258064
        %v226 = vrsqrt.pop %v225
        %v227 = vmul.f32 %v225, %v226
        %vm228 = vcmp.eq.f32.partialorder %v225, inf
        %v229 = vsel %vm228, %v225, %v227
        %vm230 = vcmp.eq.f32.partialorder %v225, 0.0
        %v231 = vand.u32 %v225, 2147483648
        %v232 = vsel %vm230, %v231, %v229
        %v233 = vadd.f32 %v232, 1e-06
        %v234 = vrcp.pop %v233
        %v235 = vmul.f32 %v220, %v234
        %v237 = vlaneseq
        %v238 = vshrl.u32 %v237, 7
        %v239 = vsub.s32 0, %v238
        %v240 = vrot.slane %v212, %v239
        %v242 = vmul.f32 %v235, %v240
        %v244 = vlaneseq
        %v245 = vshrl.u32 %v244, 7
        %v246 = vsub.s32 0, %v245
        %v247 = vrot.slane %v213, %v246
        %v249 = vadd.f32 %v242, %v247
        %250 = vst.msk [vmem:[%s210] sm:$0xff] %vm214, %v249
        %s251 = sand.u32 %s97, 1
        %s252 = scalar_lea.sflag [#allocation4], %s251
        %s253 = sand.u32 %s97, 1
        %s254 = smul.addr %s253, 8
        %s255 = scalar_lea.vmem [#allocation8], %s254
        // Predicated region
        $region45: #{tpu_custom_call.1} parent=31 // pred_check
          %p256 = pneg %p107
        $region46: #{tpu_custom_call.1} parent=31 // pred_check_branch
          %258 = sbr.rel (%p256) target = $region48
        $region47: #{tpu_custom_call.1} parent=31 // pred_region
          %s260 = ssub.s32 128, 128
          %261 = vsyncadd %s252, %s260
          %s262 = smul.addr %s21, 128
          %s263 = scalar_lea.hbm %s3, %s262
          %s265 = sshll.u32 %s255, 4
          %s266 = int_to_ptr.vmem [resolvable:$true] %s265
          %268 = dma.vmem_to_hbm [thread:$0]  %s266, 128, %s263, %s252
        $region48: #{tpu_custom_call.1} parent=31 // pred_fallthru
          _
      $region32: #{tpu_custom_call.1} parent=5 // pred_fallthru
        _
      %p269 = scmp.le.s32.totalorder 2, %s16
      // Predicated region
      $region49: #{tpu_custom_call.1} parent=5 // pred_check
        %p270 = pneg %p269
      $region50: #{tpu_custom_call.1} parent=5 // pred_check_branch
        %272 = sbr.rel (%p270) target = $region52
      $region51: #{tpu_custom_call.1} parent=5 // pred_region
        %s273 = ssub.s32 %s16, 2
        // Predicated region
        $region53: #{tpu_custom_call.1} parent=51 // pred_check
          %p274 = pneg %p113
        $region54: #{tpu_custom_call.1} parent=51 // pred_check_branch
          %276 = sbr.rel (%p274) target = $region56
        $region55: #{tpu_custom_call.1} parent=51 // pred_region
          %s277 = sand.u32 %s98, 1
          %s278 = scalar_lea.sflag [#allocation4], %s277
          %s279 = sand.u32 %s98, 1
          %s280 = smul.addr %s279, 8
          %s281 = scalar_lea.vmem [#allocation8], %s280
          %282 = dma.done %s278, 128
        $region56: #{tpu_custom_call.1} parent=51 // pred_fallthru
          _
      $region52: #{tpu_custom_call.1} parent=5 // pred_fallthru
        _
    $region6: #{tpu_custom_call.1} parent=1 // loop_footer
      %s20 = sadd.s32 1, %s16
    $region7: #{tpu_custom_call.1} parent=1 // loop_footer_branch
      %15 = sbr.rel target = $region3
    $region8: #{tpu_custom_call.1} parent=1 // loop_exit
      _
    %283 = vsyncpa [#allocation3], 1
    %s284 = scalar_lea.sflag [#allocation3], 1
    %285 = vsyncpa %s284, 1
    %286 = vsyncpa [#allocation6], 1
    %287 = vsyncpa [#allocation4], 1
    %s288 = scalar_lea.sflag [#allocation4], 1
    %289 = vsyncpa %s288, 1

</llo_original>
